<compile_context>
chip_gen: v7x
topology: tpu7x:2x2x1
jax: 0.10.0
libtpu: 0.0.40
codegen_flags: <defaults>
</compile_context>

<pallas_src>
import jax
import jax.numpy as jnp
from jax.experimental import pallas as pl
from jax.experimental.pallas import tpu as pltpu


def _attention_kernel(x_ref, w_ref, b_ref, o_ref):
    # x_ref: (1, C, T_HW) VMEM block for (batch b, spatial tile t)
    # w_ref: (C, 1)       VMEM, resident across the grid (constant index_map)
    # b_ref: (1,)         SMEM scalar bias
    x = x_ref[0]                                  # (C, T_HW)
    c = x.shape[0]
    bias = b_ref[0]
    if c >= 128:
        # Wide channel count: the contraction is big enough to feed the MXU.
        att = jnp.dot(w_ref[...].reshape(1, c), x,
                      preferred_element_type=jnp.float32) + bias     # (1, T_HW)
    else:
        # Small C (test uses C=4): a degenerate M=1 matmul wastes the MXU.
        # VPU multiply + cross-sublane reduce lands in otherwise-idle slots.
        att = jnp.sum(x * w_ref[...], axis=0, keepdims=True) + bias  # (1, T_HW)
    att = jax.nn.sigmoid(att)                     # f32 throughout
    o_ref[0] = (x * att).astype(o_ref.dtype)      # broadcast over channels


def _pick_hw_tile(hw: int, max_tile: int = 2048) -> int:
    """Lane-dense spatial tile: multiple of 128 (<= max_tile) or full extent."""
    if hw <= 128:
        return hw                                 # full-extent block is legal
    return min(max_tile, (hw // 128) * 128)


@jax.jit
def attention_module(x, weight, bias):
    """x: (B, C, H, W) float32; weight: (1, C, 1, 1); bias: (1,)."""
    B, C, H, W = x.shape
    HW = H * W
    x_flat = x.reshape(B, C, HW)
    w_col = weight.reshape(C, 1).astype(jnp.float32)
    b_vec = bias.reshape(1).astype(jnp.float32)

    t_hw = _pick_hw_tile(HW)
    n_hw = pl.cdiv(HW, t_hw)          # partial last tile is masked by Pallas

    # NOTE: input_output_aliases={0: 0} would halve peak HBM footprint, but it
    # clobbers x_flat; left off so callers can keep using x after the call.
    out_flat = pl.pallas_call(
        _attention_kernel,
        out_shape=jax.ShapeDtypeStruct((B, C, HW), x.dtype),
        grid_spec=pltpu.PrefetchScalarGridSpec(
            num_scalar_prefetch=0,
            grid=(B, n_hw),
            in_specs=[
                pl.BlockSpec((1, C, t_hw), lambda b, t: (b, 0, t)),
                pl.BlockSpec((C, 1), lambda b, t: (0, 0)),            # resident
                pl.BlockSpec(memory_space=pltpu.MemorySpace.SMEM),    # scalar bias
            ],
            out_specs=pl.BlockSpec((1, C, t_hw), lambda b, t: (b, 0, t)),
        ),
        compiler_params=pltpu.CompilerParams(
            dimension_semantics=("parallel", "parallel"),
            vmem_limit_bytes=64 * 1024 * 1024,
        ),
        cost_estimate=pl.CostEstimate(
            flops=2 * B * C * HW,
            transcendentals=B * HW,
            bytes_accessed=2 * B * C * HW * x.dtype.itemsize,
        ),
    )(x_flat, w_col, b_vec)

    return out_flat.reshape(B, C, H, W)


if __name__ == "__main__":
    key = jax.random.PRNGKey(0)
    kx, kw, kb = jax.random.split(key, 3)

    B, C, H, W = 2, 4, 16, 16
    x = jax.random.normal(kx, (B, C, H, W), dtype=jnp.float32)

    # Deterministic "Conv2d(in_channels, 1, kernel_size=1)" parameters.
    weight = jax.random.normal(kw, (1, C, 1, 1), dtype=jnp.float32) * 0.1
    bias = jax.random.normal(kb, (1,), dtype=jnp.float32) * 0.1

    out = attention_module(x, weight, bias)
    out = jax.block_until_ready(out)

    # Pure-JAX reference check (same math as the PyTorch module).
    att_ref = jax.nn.sigmoid(
        jnp.einsum("bchw,oc->bohw", x, weight.reshape(1, C))
        + bias.reshape(1, 1, 1, 1)
    )
    ref = x * att_ref
    assert jnp.allclose(out, ref, atol=1e-5, rtol=1e-5), "mismatch vs reference"

    print("KERNEL_OK")
</pallas_src>

<mosaic_0001>
module attributes {stable_mosaic.version = 11 : i64} {
  func.func @_attention_kernel(%arg0: i32, %arg1: i32, %arg2: memref<1x4x256xf32, #tpu.memory_space<vmem>>, %arg3: memref<4x1xf32, #tpu.memory_space<vmem>>, %arg4: memref<1xf32, #tpu.memory_space<smem>>, %arg5: memref<1x4x256xf32, #tpu.memory_space<vmem>>) attributes {dimension_semantics = [#tpu.dimension_semantics<parallel>, #tpu.dimension_semantics<parallel>], iteration_bounds = array<i64: 2, 1>, scalar_prefetch = 0 : i64, scratch_operands = 0 : i64, tpu.core_type = #tpu.core_type<tc>, window_params = [{transform_indices = @transform_0, window_bounds = array<i64: 1, 4, 256>}, {pipeline_mode = #tpu.pipeline_mode<synchronous>, transform_indices = @transform_1, window_bounds = array<i64: 4, 1>}, {transform_indices = @transform_2, window_bounds = array<i64: 1>}, {transform_indices = @transform_3, window_bounds = array<i64: 1, 4, 256>}]} {
    %c0 = arith.constant 0 : index
    %c0_0 = arith.constant 0 : index
    %c0_1 = arith.constant 0 : index
    %0 = vector.load %arg2[%c0, %c0_0, %c0_1] : memref<1x4x256xf32, #tpu.memory_space<vmem>>, vector<1x4x256xf32>
    %1 = vector.shape_cast %0 : vector<1x4x256xf32> to vector<4x256xf32>
    %c0_2 = arith.constant 0 : index
    %2 = memref.load %arg4[%c0_2] : memref<1xf32, #tpu.memory_space<smem>>
    %c0_3 = arith.constant 0 : index
    %c0_4 = arith.constant 0 : index
    %3 = vector.load %arg3[%c0_3, %c0_4] : memref<4x1xf32, #tpu.memory_space<vmem>>, vector<4x1xf32>
    %4 = vector.broadcast %3 : vector<4x1xf32> to vector<4x256xf32>
    %5 = arith.mulf %1, %4 : vector<4x256xf32>
    %cst = arith.constant dense<0.000000e+00> : vector<256xf32>
    %6 = vector.multi_reduction <add>, %5, %cst [0] : vector<4x256xf32> to vector<256xf32>
    %7 = vector.shape_cast %6 : vector<256xf32> to vector<1x256xf32>
    %8 = vector.broadcast %2 : f32 to vector<1x256xf32>
    %9 = arith.addf %7, %8 : vector<1x256xf32>
    %10 = arith.negf %9 : vector<1x256xf32>
    %11 = math.exp %10 : vector<1x256xf32>
    %cst_5 = arith.constant 1.000000e+00 : f32
    %12 = vector.broadcast %cst_5 : f32 to vector<1x256xf32>
    %13 = arith.addf %12, %11 : vector<1x256xf32>
    %14 = arith.divf %12, %13 : vector<1x256xf32>
    %15 = vector.broadcast %14 : vector<1x256xf32> to vector<4x256xf32>
    %16 = arith.mulf %1, %15 : vector<4x256xf32>
    %c0_6 = arith.constant 0 : index
    %c0_7 = arith.constant 0 : index
    %c0_8 = arith.constant 0 : index
    %17 = vector.load %arg5[%c0_6, %c0_7, %c0_8] : memref<1x4x256xf32, #tpu.memory_space<vmem>>, vector<1x4x256xf32>
    %18 = vector.shape_cast %17 : vector<1x4x256xf32> to vector<4x256xf32>
    %19 = vector.shape_cast %16 : vector<4x256xf32> to vector<1x4x256xf32>
    tpu.vector_store %arg5[%c0_6, %c0_7, %c0_8], %19 {strides = array<i32>} : memref<1x4x256xf32, #tpu.memory_space<vmem>>, vector<1x4x256xf32>,
    return
  }
  func.func @transform_0(%arg0: i32, %arg1: i32) -> (i32, i32, i32) {
    %c0_i32 = arith.constant 0 : i32
    %c0_i32_0 = arith.constant 0 : i32
    return %arg0, %c0_i32, %arg1 : i32, i32, i32
  }
  func.func @transform_1(%arg0: i32, %arg1: i32) -> (i32, i32) {
    %c0_i32 = arith.constant 0 : i32
    %c0_i32_0 = arith.constant 0 : i32
    %c0_i32_1 = arith.constant 0 : i32
    return %c0_i32, %c0_i32_0 : i32, i32
  }
  func.func @transform_2(%arg0: i32, %arg1: i32) -> i32 {
    %c0_i32 = arith.constant 0 : i32
    %c0_i32_0 = arith.constant 0 : i32
    return %c0_i32 : i32
  }
  func.func @transform_3(%arg0: i32, %arg1: i32) -> (i32, i32, i32) {
    %c0_i32 = arith.constant 0 : i32
    %c0_i32_0 = arith.constant 0 : i32
    return %arg0, %c0_i32, %arg1 : i32, i32, i32
  }
}

</mosaic_0001>

<llo_original>
// kernel: attention_module.1
$region0: #{attention_module.1}
  #allocation0 [shape = 'u32[]', space=smem, size = 0x4, offset = 0x4, fixed_abs, tag = 'smem constant byte address 0x4 - core index']
  #allocation1 [shape = 'u32[144,128]{1,0:T(1,128)}', space=vmem, size = 0x12000, scoped, tag = 'internal scratch']
  #allocation2 [shape = 'f32[1]{0:T(128)S(6)}', space=smem, size = 0x200, scoped, tag = 'scoped memory for attention_module.1']
  %s0 = inlined_call_operand.hbm [shape: f32[2,4,256], index: 0, kind: input, shape index: {}]
  %s1 = inlined_call_operand.hbm [shape: f32[4,1], index: 1, kind: input, shape index: {}]
  %s2 = inlined_call_operand.<no memory space> [shape: f32[1], index: 2, kind: input, shape index: {}]
  %s3 = inlined_call_operand.hbm [shape: f32[2,4,256], index: 3, kind: output, shape index: {}]
  %s4 = sld [smem:[#allocation0]]
  $region53: #{attention_module.1} parent=0
    _
  %s6 = ssub.s32 1, %s4
  %s7 = scalar_select 0, %s6, %s4
  %8 = sst [smem:[#allocation2]] %s2
  $region1: #{attention_module.1} parent=0
    #allocation3 [shape = 'u8[8192]{0}', space=vmem, size = 0x2000, scoped, tag = 'input window, operand 0']
    #allocation4 [shape = 's32[2]{0}', space=sflag, size = 0x8, scoped, tag = 'scoped memory for attention_module.1']
    #allocation5 [shape = 's32[2]{0}', space=sflag, size = 0x8, scoped, tag = 'scoped memory for attention_module.1']
    #allocation6 [shape = 'u8[2048]{0}', space=vmem, size = 0x800, scoped, tag = 'input window, operand 1, single buffered']
    #allocation7 [shape = 's32[1]{0}', space=sflag, size = 0x4, scoped, tag = 'scoped memory for attention_module.1']
    #allocation8 [shape = 'u8[8192]{0}', space=vmem, size = 0x2000, scoped, tag = 'output window, operand 0']
    %9 = vsyncpa [#allocation4], 0
    %s10 = scalar_lea.sflag [#allocation4], 1
    %11 = vsyncpa %s10, 0
    %12 = vsyncpa [#allocation7], 0
    %13 = vsyncpa [#allocation5], 0
    %s14 = scalar_lea.sflag [#allocation5], 1
    %15 = vsyncpa %s14, 0
    loop: start=0, step=1, limit=4
    $region2: #{attention_module.1} parent=1 // loop_pre_header
      _
    $region3: #{attention_module.1} parent=1 // loop_header
      %s17 = sphi 0, %s21
      %p18 = scmp.ge.s32.totalorder %s17, 4
      %s24 = sphi 0, %s36
      %s25 = sphi 0, %s32
      %s26 = sphi 0, %s24
      %s27 = sphi 0, %s25
      %s28 = sphi 0, %s26
      %s29 = sphi 0, %s27
      %s41 = sphi 0, %s43
      %s44 = sphi 0, %s41
      %s45 = sphi 0, %s44
      %s61 = sphi 0, %s45
      %s65 = sphi 0, %s65
      %s67 = sphi 0, %s65
      %s68 = sphi 0, %s67
      %s82 = sphi 0, %s68
      %s86 = sphi 0, %s86
      %s88 = sphi 0, %s86
      %s89 = sphi 0, %s88
      %s103 = sphi 0, %s89
      %s111 = sphi 0, %s113
      %s114 = sphi 0, %s111
      %s115 = sphi 0, %s114
      %s131 = sphi 0, %s115
    $region4: #{attention_module.1} parent=1 // loop_header_branch
      %20 = sbr.rel (%p18) target = $region8
    $region5: #{attention_module.1} parent=1 // loop_body
      %s22 = ssub.s32 %s17, 1
      %s23 = ssub.s32 %s17, 2
      %s30 = sadd.s32 1, %s25
      %p31 = scmp.ge.s32.totalorder %s30, 1
      %s32 = scalar_select %p31, 0, %s30
      %s33 = sadd.s32 1, %s24
      %s34 = scalar_select %p31, %s33, %s24
      %p35 = scmp.ge.s32.totalorder %s34, 2
      %s36 = scalar_select %p35, 0, %s34
      %s37 = ssub.s32 %s24, %s36
      %s38 = ssub.s32 %s25, %s32
      %s39 = sor.u32 %s37, %s38
      %p40 = scmp.eq.s32.totalorder %s39, 0
      %s42 = sadd.s32 %s41, 1
      %s43 = scalar_select %p40, %s41, %s42
      %p46 = pneg %p40
      %p47 = scmp.eq.s32.totalorder %s17, 1
      %p48 = por %p46, %p47
      %p49 = scmp.ne.s32.totalorder %s41, %s44
      %p50 = scmp.eq.s32.totalorder %s17, 0
      %p51 = por %p49, %p50
      %p52 = scmp.ne.s32.totalorder %s41, %s44
      %p53 = scmp.eq.s32.totalorder %s22, 1
      %p54 = por %p52, %p53
      %p55 = scmp.ne.s32.totalorder %s44, %s45
      %p56 = scmp.eq.s32.totalorder %s22, 0
      %p57 = por %p55, %p56
      %p58 = scmp.ne.s32.totalorder %s44, %s45
      %p59 = scmp.eq.s32.totalorder %s23, 1
      %p60 = por %p58, %p59
      %p62 = scmp.ne.s32.totalorder %s45, %s61
      %p63 = scmp.eq.s32.totalorder %s23, 0
      %p64 = por %p62, %p63
      %s66 = sadd.s32 %s65, 1
      %p69 = scmp.eq.s32.totalorder %s17, 1
      %p70 = scmp.ne.s32.totalorder %s65, %s67
      %p71 = scmp.eq.s32.totalorder %s17, 0
      %p72 = por %p70, %p71
      %p73 = scmp.ne.s32.totalorder %s65, %s67
      %p74 = scmp.eq.s32.totalorder %s22, 1
      %p75 = por %p73, %p74
      %p76 = scmp.ne.s32.totalorder %s67, %s68
      %p77 = scmp.eq.s32.totalorder %s22, 0
      %p78 = por %p76, %p77
      %p79 = scmp.ne.s32.totalorder %s67, %s68
      %p80 = scmp.eq.s32.totalorder %s23, 1
      %p81 = por %p79, %p80
      %p83 = scmp.ne.s32.totalorder %s68, %s82
      %p84 = scmp.eq.s32.totalorder %s23, 0
      %p85 = por %p83, %p84
      %s87 = sadd.s32 %s86, 1
      %p90 = scmp.eq.s32.totalorder %s17, 1
      %p91 = scmp.ne.s32.totalorder %s86, %s88
      %p92 = scmp.eq.s32.totalorder %s17, 0
      %p93 = por %p91, %p92
      %p94 = scmp.ne.s32.totalorder %s86, %s88
      %p95 = scmp.eq.s32.totalorder %s22, 1
      %p96 = por %p94, %p95
      %p97 = scmp.ne.s32.totalorder %s88, %s89
      %p98 = scmp.eq.s32.totalorder %s22, 0
      %p99 = por %p97, %p98
      %p100 = scmp.ne.s32.totalorder %s88, %s89
      %p101 = scmp.eq.s32.totalorder %s23, 1
      %p102 = por %p100, %p101
      %p104 = scmp.ne.s32.totalorder %s89, %s103
      %p105 = scmp.eq.s32.totalorder %s23, 0
      %p106 = por %p104, %p105
      %s107 = ssub.s32 %s24, %s36
      %s108 = ssub.s32 %s25, %s32
      %s109 = sor.u32 %s107, %s108
      %p110 = scmp.eq.s32.totalorder %s109, 0
      %s112 = sadd.s32 %s111, 1
      %s113 = scalar_select %p110, %s111, %s112
      %p116 = pneg %p110
      %p117 = scmp.eq.s32.totalorder %s17, 1
      %p118 = por %p116, %p117
      %p119 = scmp.ne.s32.totalorder %s111, %s114
      %p120 = scmp.eq.s32.totalorder %s17, 0
      %p121 = por %p119, %p120
      %p122 = scmp.ne.s32.totalorder %s111, %s114
      %p123 = scmp.eq.s32.totalorder %s22, 1
      %p124 = por %p122, %p123
      %p125 = scmp.ne.s32.totalorder %s114, %s115
      %p126 = scmp.eq.s32.totalorder %s22, 0
      %p127 = por %p125, %p126
      %p128 = scmp.ne.s32.totalorder %s114, %s115
      %p129 = scmp.eq.s32.totalorder %s23, 1
      %p130 = por %p128, %p129
      %p132 = scmp.ne.s32.totalorder %s115, %s131
      %p133 = scmp.eq.s32.totalorder %s23, 0
      %p134 = por %p132, %p133
      %p135 = scmp.le.s32.totalorder 1, %s17
      %p136 = scmp.lt.s32.totalorder %s17, 3
      %p137 = pnand %p135, %p136
      %p138 = pneg %p137
      // Predicated region
      $region9: #{attention_module.1} parent=5 // pred_check
        _
      $region10: #{attention_module.1} parent=5 // pred_check_branch
        %140 = sbr.rel (%p137) target = $region12
      $region11: #{attention_module.1} parent=5 // pred_region
        %s141 = ssub.s32 %s17, 1
        // Predicated region
        $region13: #{attention_module.1} parent=11 // pred_check
          %p142 = pneg %p78
        $region14: #{attention_module.1} parent=11 // pred_check_branch
          %144 = sbr.rel (%p142) target = $region16
        $region15: #{attention_module.1} parent=11 // pred_region
          %s146 = ssub.s32 64, 64
          %147 = vsyncadd [#allocation7], %s146
          %s149 = sshll.u32 [#allocation6], 4
          %s150 = int_to_ptr.vmem [resolvable:$true] %s149
          %152 = dma.hbm_to_vmem [thread:$0]  %s1, 64, %s150, [#allocation7]
        $region16: #{attention_module.1} parent=11 // pred_fallthru
          _
        // Predicated region
        $region17: #{attention_module.1} parent=11 // pred_check
          %p153 = pneg %p99
        $region18: #{attention_module.1} parent=11 // pred_check_branch
          %155 = sbr.rel (%p153) target = $region20
        $region19: #{attention_module.1} parent=11 // pred_region
          _
        $region20: #{attention_module.1} parent=11 // pred_fallthru
          _
      $region12: #{attention_module.1} parent=5 // pred_fallthru
        _
      %p156 = scmp.lt.s32.totalorder %s17, 2
      // Predicated region
      $region21: #{attention_module.1} parent=5 // pred_check
        %p157 = pneg %p156
      $region22: #{attention_module.1} parent=5 // pred_check_branch
        %159 = sbr.rel (%p157) target = $region24
      $region23: #{attention_module.1} parent=5 // pred_region
        // Predicated region
        $region25: #{attention_module.1} parent=23 // pred_check
          %p160 = pneg %p51
        $region26: #{attention_module.1} parent=23 // pred_check_branch
          %162 = sbr.rel (%p160) target = $region28
        $region27: #{attention_module.1} parent=23 // pred_region
          %s163 = sand.u32 %s41, 1
          %s164 = scalar_lea.sflag [#allocation4], %s163
          %s165 = sand.u32 %s41, 1
          %s166 = smul.addr %s165, 8
          %s167 = scalar_lea.vmem [#allocation3], %s166
          %s168 = smul.u32 2, %s25
          %s170 = ssub.s32 128, 128
          %171 = vsyncadd %s164, %s170
          %s172 = smul.addr %s24, 2
          %s173 = sadd.s32 %s168, %s172
          %s174 = smul.addr %s173, 64
          %s175 = scalar_lea.hbm %s0, %s174
          %s177 = sshll.u32 %s167, 4
          %s178 = int_to_ptr.vmem [resolvable:$true] %s177
          %180 = dma.hbm_to_vmem [thread:$0]  %s175, 128, %s178, %s164
        $region28: #{attention_module.1} parent=23 // pred_fallthru
          _
      $region24: #{attention_module.1} parent=5 // pred_fallthru
        _
      %p181 = scmp.le.s32.totalorder 1, %s17
      %p182 = scmp.lt.s32.totalorder %s17, 3
      %p183 = pnand %p181, %p182
      %p184 = pneg %p183
      // Predicated region
      $region29: #{attention_module.1} parent=5 // pred_check
        _
      $region30: #{attention_module.1} parent=5 // pred_check_branch
        %186 = sbr.rel (%p183) target = $region32
      $region31: #{attention_module.1} parent=5 // pred_region
        %s187 = ssub.s32 %s17, 1
        %s188 = sand.u32 %s44, 1
        %s189 = scalar_lea.sflag [#allocation4], %s188
        %s190 = sand.u32 %s44, 1
        %s191 = smul.addr %s190, 8
        %s192 = scalar_lea.vmem [#allocation3], %s191
        // Predicated region
        $region33: #{attention_module.1} parent=31 // pred_check
          %p193 = pneg %p57
        $region34: #{attention_module.1} parent=31 // pred_check_branch
          %195 = sbr.rel (%p193) target = $region36
        $region35: #{attention_module.1} parent=31 // pred_region
          %196 = dma.done %s189, 128
        $region36: #{attention_module.1} parent=31 // pred_fallthru
          _
        // Predicated region
        $region37: #{attention_module.1} parent=31 // pred_check
          %p197 = pneg %p78
        $region38: #{attention_module.1} parent=31 // pred_check_branch
          %199 = sbr.rel (%p197) target = $region40
        $region39: #{attention_module.1} parent=31 // pred_region
          %200 = dma.done [#allocation7], 64
        $region40: #{attention_module.1} parent=31 // pred_fallthru
          _
        %s201 = sand.u32 %s44, 1
        %s202 = scalar_lea.sflag [#allocation4], %s201
        %s203 = sand.u32 %s44, 1
        %s204 = smul.addr %s203, 8
        %s205 = scalar_lea.vmem [#allocation3], %s204
        %p206 = pneg %p57
        %p207 = pneg %p54
        %p208 = pneg %p78
        %p209 = pneg %p75
        %p210 = pneg %p99
        %p211 = pneg %p96
        %p212 = pneg %p127
        %p213 = pneg %p124
        %s214 = sand.u32 %s114, 1
        %s215 = scalar_lea.sflag [#allocation5], %s214
        %s216 = sand.u32 %s114, 1
        %s217 = smul.addr %s216, 8
        %s218 = scalar_lea.vmem [#allocation8], %s217
        %s219 = smul.u32 2, %s27
        %s220 = smul.u32 2, %s27
        %v221 = vld [vmem:[%s192] sm:$0xff]
        %s222 = sld [smem:[#allocation2]]
        %v223 = vld [vmem:[#allocation6] sm:$0xf]
        %225 = vset.pattern.permute.xlu0 0
        %226 = vperm.xlu0 %225, %v223
        %v227 = vpop.permute.xlu0 %226
        %v229 = vunpack.c.l.s4 839922192
        %v230 = vunpack.c.0.s8 %v229
        %v231 = vlaneseq
        %v232 = vshrl.u32 %v231, 7
        %v233 = vsub.s32 %v230, %v232
        %v234 = vrot.slane %v227, %v233
        %v236 = vmul.f32 %v221, %v234
        %v238 = vcombine.high %v236, %v236
        %vm240 = vcmask 1043456
        %v241 = vsel %vm240, %v236, 0.0
        %v242 = vrot.slane %v241, 4
        %v243 = vadd.f32 %v241, %v242
        %v244 = vrot.slane %v243, 2
        %v245 = vadd.f32 %v243, %v244
        %v246 = vrot.slane %v245, 1
        %v247 = vadd.f32 %v245, %v246
        %v248 = vsel %vm240, %v238, 0.0
        %v249 = vrot.slane %v248, 4
        %v250 = vadd.f32 %v248, %v249
        %v251 = vrot.slane %v250, 2
        %v252 = vadd.f32 %v250, %v251
        %v253 = vrot.slane %v252, 1
        %v254 = vadd.f32 %v252, %v253
        %v255 = vstv %s222
        %v256 = vadd.f32 %v247, %v255
        %v257 = vadd.f32 %v254, %v255
        %v258 = vxor.u32 %v256, 2147483648
        %v259 = vxor.u32 %v257, 2147483648
        %v260 = vmul.f32 %v258, 1.442695
        %v261 = vpow.pop %v260
        %v262 = vmul.f32 %v259, 1.442695
        %v263 = vpow.pop %v262
        %v264 = vadd.f32 %v261, 1.0
        %v265 = vadd.f32 %v263, 1.0
        %v266 = vrcp.pop %v264
        %v267 = vmul.f32 1.0, %v266
        %v268 = vrcp.pop %v265
        %v269 = vmul.f32 1.0, %v268
        %v272 = vcombine.low %v267, %v269
        %v274 = vmul.f32 %v221, %v272
        %275 = vst [vmem:[%s218] sm:$0xff] %v274
        %s276 = sand.u32 %s114, 1
        %s277 = scalar_lea.sflag [#allocation5], %s276
        %s278 = sand.u32 %s114, 1
        %s279 = smul.addr %s278, 8
        %s280 = scalar_lea.vmem [#allocation8], %s279
        // Predicated region
        $region41: #{attention_module.1} parent=31 // pred_check
          %p281 = pneg %p124
        $region42: #{attention_module.1} parent=31 // pred_check_branch
          %283 = sbr.rel (%p281) target = $region44
        $region43: #{attention_module.1} parent=31 // pred_region
          %s284 = smul.u32 2, %s27
          %s286 = ssub.s32 128, 128
          %287 = vsyncadd %s277, %s286
          %s288 = smul.addr %s26, 2
          %s289 = sadd.s32 %s284, %s288
          %s290 = smul.addr %s289, 64
          %s291 = scalar_lea.hbm %s3, %s290
          %s293 = sshll.u32 %s280, 4
          %s294 = int_to_ptr.vmem [resolvable:$true] %s293
          %296 = dma.vmem_to_hbm [thread:$0]  %s294, 128, %s291, %s277
        $region44: #{attention_module.1} parent=31 // pred_fallthru
          _
      $region32: #{attention_module.1} parent=5 // pred_fallthru
        _
      %p297 = scmp.le.s32.totalorder 2, %s17
      // Predicated region
      $region45: #{attention_module.1} parent=5 // pred_check
        %p298 = pneg %p297
      $region46: #{attention_module.1} parent=5 // pred_check_branch
        %300 = sbr.rel (%p298) target = $region48
      $region47: #{attention_module.1} parent=5 // pred_region
        %s301 = ssub.s32 %s17, 2
        // Predicated region
        $region49: #{attention_module.1} parent=47 // pred_check
          %p302 = pneg %p130
        $region50: #{attention_module.1} parent=47 // pred_check_branch
          %304 = sbr.rel (%p302) target = $region52
        $region51: #{attention_module.1} parent=47 // pred_region
          %s305 = sand.u32 %s115, 1
          %s306 = scalar_lea.sflag [#allocation5], %s305
          %s307 = sand.u32 %s115, 1
          %s308 = smul.addr %s307, 8
          %s309 = scalar_lea.vmem [#allocation8], %s308
          %310 = dma.done %s306, 128
        $region52: #{attention_module.1} parent=47 // pred_fallthru
          _
      $region48: #{attention_module.1} parent=5 // pred_fallthru
        _
    $region6: #{attention_module.1} parent=1 // loop_footer
      %s21 = sadd.s32 1, %s17
    $region7: #{attention_module.1} parent=1 // loop_footer_branch
      %16 = sbr.rel target = $region3
    $region8: #{attention_module.1} parent=1 // loop_exit
      _
    %311 = vsyncpa [#allocation4], 1
    %s312 = scalar_lea.sflag [#allocation4], 1
    %313 = vsyncpa %s312, 1
    %314 = vsyncpa [#allocation7], 1
    %315 = vsyncpa [#allocation5], 1
    %s316 = scalar_lea.sflag [#allocation5], 1
    %317 = vsyncpa %s316, 1

</llo_original>
